<compile_context>
chip_gen: v7x
topology: tpu7x:2x2x1
jax: 0.10.0
libtpu: 0.0.40
codegen_flags: <defaults>
</compile_context>

<pallas_src>
import jax
import jax.numpy as jnp
from jax import lax
from jax.experimental import pallas as pl
from jax.experimental.pallas import tpu as pltpu

EPS = 1e-5


def _make_bn_kernel(N, C, HW):
    NC = N * C
    inv_count = 1.0 / float(N * HW)

    def kernel(x_ref, g_ref, b_ref, o_ref):
        # x_ref/o_ref: (N*C, HW); row r holds sample r // C, channel r % C.
        # g_ref/b_ref: (1, C)
        # Stats accumulate in f32 (a no-op cast for f32 inputs).
        xf = x_ref[...].astype(jnp.float32)

        # --- one pass over x: per-row sum and sum-of-squares (lane reduces) ---
        row_s = jnp.sum(xf, axis=1, keepdims=True)          # (NC, 1)
        row_ss = jnp.sum(xf * xf, axis=1, keepdims=True)    # (NC, 1)

        # --- fold rows of the same channel with a tiny one-hot (NC, C) ---
        rid = lax.broadcasted_iota(jnp.int32, (NC, C), 0)
        cid = lax.broadcasted_iota(jnp.int32, (NC, C), 1)
        onehot = (rid % C == cid).astype(jnp.float32)        # (NC, C)

        ch_s = jnp.sum(row_s * onehot, axis=0, keepdims=True)    # (1, C)
        ch_ss = jnp.sum(row_ss * onehot, axis=0, keepdims=True)  # (1, C)

        mean = ch_s * inv_count
        # One-pass variance; clamp against tiny negative values from cancellation.
        var = jnp.maximum(ch_ss * inv_count - mean * mean, 0.0)
        inv_std = lax.rsqrt(var + EPS)                           # EUP op

        gamma = g_ref[...].astype(jnp.float32)                   # (1, C)
        beta = b_ref[...].astype(jnp.float32)                    # (1, C)
        scale = gamma * inv_std                                  # (1, C)
        shift = beta - mean * scale                              # (1, C)

        # --- map per-channel scale/shift back to per-row (NC, 1) ---
        scale_rows = jnp.sum(onehot * scale, axis=1, keepdims=True)  # (NC, 1)
        shift_rows = jnp.sum(onehot * shift, axis=1, keepdims=True)  # (NC, 1)

        # --- normalize: 2 vector ops per element, lane-dense full-width store ---
        o_ref[...] = (xf * scale_rows + shift_rows).astype(o_ref.dtype)

    return kernel


def conv_norm(x, gamma, beta):
    """x: (bs, seq, C, H, W); gamma/beta: (C,). Returns (bs, seq, C, H, W)."""
    bs, seq, C, H, W = x.shape
    N = bs * seq
    HW = H * W

    # Free, layout-preserving reshapes (row-major) — no transposes, no extra
    # HBM passes.
    x2 = x.reshape(N * C, HW)
    g2 = gamma.reshape(1, C).astype(jnp.float32)
    b2 = beta.reshape(1, C).astype(jnp.float32)

    out2 = pl.pallas_call(
        _make_bn_kernel(N, C, HW),
        out_shape=jax.ShapeDtypeStruct((N * C, HW), x.dtype),
        in_specs=[
            pl.BlockSpec((N * C, HW), lambda: (0, 0)),
            pl.BlockSpec((1, C), lambda: (0, 0)),
            pl.BlockSpec((1, C), lambda: (0, 0)),
        ],
        out_specs=pl.BlockSpec((N * C, HW), lambda: (0, 0)),
        compiler_params=pltpu.CompilerParams(vmem_limit_bytes=32 << 20),
    )(x2, g2, b2)

    return out2.reshape(bs, seq, C, H, W)


def _reference(x, gamma, beta):
    bs, seq, C, H, W = x.shape
    xf = x.reshape(bs * seq, C, H, W).astype(jnp.float32)
    mean = jnp.mean(xf, axis=(0, 2, 3), keepdims=True)
    var = jnp.mean((xf - mean) ** 2, axis=(0, 2, 3), keepdims=True)
    y = (xf - mean) * lax.rsqrt(var + EPS)
    y = y * gamma.reshape(1, C, 1, 1) + beta.reshape(1, C, 1, 1)
    return y.reshape(bs, seq, C, H, W).astype(x.dtype)


if __name__ == "__main__":
    # d_model = (C, H, W) = (4, 16, 16); input x: (bs, seq, C, H, W)
    bs, seq, C, H, W = 2, 8, 4, 16, 16

    key = jax.random.PRNGKey(0)
    kx, kg, kb = jax.random.split(key, 3)
    x = jax.random.normal(kx, (bs, seq, C, H, W), dtype=jnp.float32)
    # Deterministic affine params (PyTorch default would be ones/zeros; use
    # non-trivial deterministic values to exercise the affine path).
    gamma = 1.0 + 0.1 * jax.random.normal(kg, (C,), dtype=jnp.float32)
    beta = 0.1 * jax.random.normal(kb, (C,), dtype=jnp.float32)

    out = jax.block_until_ready(conv_norm(x, gamma, beta))
    ref = _reference(x, gamma, beta)

    assert out.shape == (bs, seq, C, H, W)
    assert jnp.allclose(out, ref, atol=1e-5, rtol=1e-5)
    print("KERNEL_OK")
</pallas_src>

<mosaic_0001>
module attributes {stable_mosaic.version = 11 : i64} {
  func.func @kernel(%arg0: memref<64x256xf32, #tpu.memory_space<vmem>>, %arg1: memref<1x4xf32, #tpu.memory_space<vmem>>, %arg2: memref<1x4xf32, #tpu.memory_space<vmem>>, %arg3: memref<64x256xf32, #tpu.memory_space<vmem>>) attributes {dimension_semantics = [], scalar_prefetch = 0 : i64, scratch_operands = 0 : i64, tpu.core_type = #tpu.core_type<tc>} {
    %c0 = arith.constant 0 : index
    %c0_0 = arith.constant 0 : index
    %0 = vector.load %arg0[%c0, %c0_0] : memref<64x256xf32, #tpu.memory_space<vmem>>, vector<64x256xf32>
    %cst = arith.constant dense<0.000000e+00> : vector<64xf32>
    %1 = vector.multi_reduction <add>, %0, %cst [1] : vector<64x256xf32> to vector<64xf32>
    %2 = vector.shape_cast %1 : vector<64xf32> to vector<64x1xf32>
    %3 = arith.mulf %0, %0 : vector<64x256xf32>
    %cst_1 = arith.constant dense<0.000000e+00> : vector<64xf32>
    %4 = vector.multi_reduction <add>, %3, %cst_1 [1] : vector<64x256xf32> to vector<64xf32>
    %5 = vector.shape_cast %4 : vector<64xf32> to vector<64x1xf32>
    %6 = tpu.iota {dimensions = array<i32: 0>} : vector<64x4xi32>
    %7 = tpu.iota {dimensions = array<i32: 1>} : vector<64x4xi32>
    %c4_i32 = arith.constant 4 : i32
    %c0_i32 = arith.constant 0 : i32
    %8 = arith.cmpi eq, %c4_i32, %c0_i32 : i32
    %c1_i32 = arith.constant 1 : i32
    %9 = arith.select %8, %c1_i32, %c4_i32 : i32
    %10 = vector.broadcast %9 : i32 to vector<64x4xi32>
    %11 = arith.remsi %6, %10 : vector<64x4xi32>
    %c0_i32_2 = arith.constant 0 : i32
    %12 = vector.broadcast %c0_i32_2 : i32 to vector<64x4xi32>
    %13 = arith.cmpi ne, %11, %12 : vector<64x4xi32>
    %c0_i32_3 = arith.constant 0 : i32
    %14 = vector.broadcast %c0_i32_3 : i32 to vector<64x4xi32>
    %15 = arith.cmpi slt, %11, %14 : vector<64x4xi32>
    %c0_i32_4 = arith.constant 0 : i32
    %16 = arith.cmpi slt, %9, %c0_i32_4 : i32
    %17 = vector.broadcast %16 : i1 to vector<64x4xi1>
    %18 = vector.broadcast %17 : vector<64x4xi1> to vector<64x4xi1>
    %19 = arith.xori %15, %18 : vector<64x4xi1>
    %20 = arith.andi %19, %13 : vector<64x4xi1>
    %21 = vector.broadcast %9 : i32 to vector<64x4xi32>
    %22 = arith.addi %11, %21 : vector<64x4xi32>
    %23 = arith.select %20, %22, %11 : vector<64x4xi1>, vector<64x4xi32>
    %24 = arith.cmpi eq, %23, %7 : vector<64x4xi32>
    %25 = arith.extui %24 : vector<64x4xi1> to vector<64x4xi32>
    %26 = arith.sitofp %25 : vector<64x4xi32> to vector<64x4xf32>
    %27 = vector.broadcast %2 : vector<64x1xf32> to vector<64x4xf32>
    %28 = arith.mulf %27, %26 : vector<64x4xf32>
    %cst_5 = arith.constant dense<0.000000e+00> : vector<4xf32>
    %29 = vector.multi_reduction <add>, %28, %cst_5 [0] : vector<64x4xf32> to vector<4xf32>
    %30 = vector.shape_cast %29 : vector<4xf32> to vector<1x4xf32>
    %31 = vector.broadcast %5 : vector<64x1xf32> to vector<64x4xf32>
    %32 = arith.mulf %31, %26 : vector<64x4xf32>
    %cst_6 = arith.constant dense<0.000000e+00> : vector<4xf32>
    %33 = vector.multi_reduction <add>, %32, %cst_6 [0] : vector<64x4xf32> to vector<4xf32>
    %34 = vector.shape_cast %33 : vector<4xf32> to vector<1x4xf32>
    %cst_7 = arith.constant 2.44140625E-4 : f32
    %35 = vector.broadcast %cst_7 : f32 to vector<1x4xf32>
    %36 = arith.mulf %30, %35 : vector<1x4xf32>
    %cst_8 = arith.constant 2.44140625E-4 : f32
    %37 = vector.broadcast %cst_8 : f32 to vector<1x4xf32>
    %38 = arith.mulf %34, %37 : vector<1x4xf32>
    %39 = arith.mulf %36, %36 : vector<1x4xf32>
    %40 = arith.subf %38, %39 : vector<1x4xf32>
    %cst_9 = arith.constant 0.000000e+00 : f32
    %41 = vector.broadcast %cst_9 : f32 to vector<1x4xf32>
    %42 = arith.maximumf %40, %41 : vector<1x4xf32>
    %cst_10 = arith.constant 9.99999974E-6 : f32
    %43 = vector.broadcast %cst_10 : f32 to vector<1x4xf32>
    %44 = arith.addf %42, %43 : vector<1x4xf32>
    %45 = math.rsqrt %44 : vector<1x4xf32>
    %c0_11 = arith.constant 0 : index
    %c0_12 = arith.constant 0 : index
    %46 = vector.load %arg1[%c0_11, %c0_12] : memref<1x4xf32, #tpu.memory_space<vmem>>, vector<1x4xf32>
    %c0_13 = arith.constant 0 : index
    %c0_14 = arith.constant 0 : index
    %47 = vector.load %arg2[%c0_13, %c0_14] : memref<1x4xf32, #tpu.memory_space<vmem>>, vector<1x4xf32>
    %48 = arith.mulf %46, %45 : vector<1x4xf32>
    %49 = arith.mulf %36, %48 : vector<1x4xf32>
    %50 = arith.subf %47, %49 : vector<1x4xf32>
    %51 = vector.broadcast %48 : vector<1x4xf32> to vector<64x4xf32>
    %52 = arith.mulf %26, %51 : vector<64x4xf32>
    %cst_15 = arith.constant dense<0.000000e+00> : vector<64xf32>
    %53 = vector.multi_reduction <add>, %52, %cst_15 [1] : vector<64x4xf32> to vector<64xf32>
    %54 = vector.shape_cast %53 : vector<64xf32> to vector<64x1xf32>
    %55 = vector.broadcast %50 : vector<1x4xf32> to vector<64x4xf32>
    %56 = arith.mulf %26, %55 : vector<64x4xf32>
    %cst_16 = arith.constant dense<0.000000e+00> : vector<64xf32>
    %57 = vector.multi_reduction <add>, %56, %cst_16 [1] : vector<64x4xf32> to vector<64xf32>
    %58 = vector.shape_cast %57 : vector<64xf32> to vector<64x1xf32>
    %59 = vector.broadcast %54 : vector<64x1xf32> to vector<64x256xf32>
    %60 = arith.mulf %0, %59 : vector<64x256xf32>
    %61 = vector.broadcast %58 : vector<64x1xf32> to vector<64x256xf32>
    %62 = arith.addf %60, %61 : vector<64x256xf32>
    %c0_17 = arith.constant 0 : index
    %c0_18 = arith.constant 0 : index
    %63 = vector.load %arg3[%c0_17, %c0_18] : memref<64x256xf32, #tpu.memory_space<vmem>>, vector<64x256xf32>
    tpu.vector_store %arg3[%c0_17, %c0_18], %62 {strides = array<i32>} : memref<64x256xf32, #tpu.memory_space<vmem>>, vector<64x256xf32>,
    return
  }
}

</mosaic_0001>

<llo_original>
// kernel: tpu_custom_call.1
$region0: #{tpu_custom_call.1}
  #allocation0 [shape = 'u32[]', space=smem, size = 0x4, offset = 0x4, fixed_abs, tag = 'smem constant byte address 0x4 - core index']
  #allocation1 [shape = 'u32[144,128]{1,0:T(1,128)}', space=vmem, size = 0x12000, scoped, tag = 'internal scratch']
  %s0 = inlined_call_operand.hbm [shape: f32[64,256], index: 0, kind: input, shape index: {}]
  %s1 = inlined_call_operand.vmem [shape: f32[1,4], index: 1, kind: input, shape index: {}]
  %s2 = inlined_call_operand.vmem [shape: f32[1,4], index: 2, kind: input, shape index: {}]
  %s3 = inlined_call_operand.hbm [shape: f32[64,256], index: 3, kind: output, shape index: {}]
  %s4 = sld [smem:[#allocation0]]
  $region26: #{tpu_custom_call.1} parent=0
    _
  %s6 = ssub.s32 1, %s4
  %s7 = scalar_select 0, %s6, %s4
  $region1: #{tpu_custom_call.1} parent=0
    #allocation2 [shape = 'u8[65536]{0}', space=vmem, size = 0x10000, scoped, tag = 'input window, operand 0, single buffered']
    #allocation3 [shape = 's32[1]{0}', space=sflag, size = 0x4, scoped, tag = 'scoped memory for tpu_custom_call.1']
    #allocation4 [shape = 's32[1]{0}', space=sflag, size = 0x4, scoped, tag = 'scoped memory for tpu_custom_call.1']
    #allocation5 [shape = 'u8[65536]{0}', space=vmem, size = 0x10000, scoped, tag = 'output window, operand 0, single buffered']
    %8 = vsyncpa [#allocation3], 0
    %9 = vsyncpa [#allocation4], 0
    // Predicated region
    $region2: #{tpu_custom_call.1} parent=1 // pred_check
      _
    $region3: #{tpu_custom_call.1} parent=1 // pred_check_branch
      %11 = sbr.rel (0) target = $region5
    $region4: #{tpu_custom_call.1} parent=1 // pred_region
      %s13 = ssub.s32 2048, 2048
      %14 = vsyncadd [#allocation3], %s13
      %s15 = sshll.u32 [#allocation2], 4
      %s16 = int_to_ptr.vmem [resolvable:$true] %s15
      %21 = dma.hbm_to_vmem [thread:$0]  %s0, 2048, %s16, [#allocation3], 256, 256, 16
    $region5: #{tpu_custom_call.1} parent=1 // pred_fallthru
      _
    // Predicated region
    $region6: #{tpu_custom_call.1} parent=1 // pred_check
      _
    $region7: #{tpu_custom_call.1} parent=1 // pred_check_branch
      %23 = sbr.rel (0) target = $region9
    $region8: #{tpu_custom_call.1} parent=1 // pred_region
      _
    $region9: #{tpu_custom_call.1} parent=1 // pred_fallthru
      _
    // Predicated region
    $region10: #{tpu_custom_call.1} parent=1 // pred_check
      _
    $region11: #{tpu_custom_call.1} parent=1 // pred_check_branch
      %25 = sbr.rel (0) target = $region13
    $region12: #{tpu_custom_call.1} parent=1 // pred_region
      _
    $region13: #{tpu_custom_call.1} parent=1 // pred_fallthru
      _
    // Predicated region
    $region14: #{tpu_custom_call.1} parent=1 // pred_check
      _
    $region15: #{tpu_custom_call.1} parent=1 // pred_check_branch
      %27 = sbr.rel (0) target = $region17
    $region16: #{tpu_custom_call.1} parent=1 // pred_region
      %28 = dma.done [#allocation3], 2048
    $region17: #{tpu_custom_call.1} parent=1 // pred_fallthru
      _
    %v29 = vld [vmem:[#allocation2] sm:$0xff]
    %v30 = vld [vmem:[#allocation2 + $0x8] sm:$0xff]
    %v31 = vld [vmem:[#allocation2 + $0x10] sm:$0xff]
    %v32 = vld [vmem:[#allocation2 + $0x18] sm:$0xff]
    %v33 = vld [vmem:[#allocation2 + $0x20] sm:$0xff]
    %v34 = vld [vmem:[#allocation2 + $0x28] sm:$0xff]
    %v35 = vld [vmem:[#allocation2 + $0x30] sm:$0xff]
    %v36 = vld [vmem:[#allocation2 + $0x38] sm:$0xff]
    %v37 = vld [vmem:[#allocation2 + $0x40] sm:$0xff]
    %v38 = vld [vmem:[#allocation2 + $0x48] sm:$0xff]
    %v39 = vld [vmem:[#allocation2 + $0x50] sm:$0xff]
    %v40 = vld [vmem:[#allocation2 + $0x58] sm:$0xff]
    %v41 = vld [vmem:[#allocation2 + $0x60] sm:$0xff]
    %v42 = vld [vmem:[#allocation2 + $0x68] sm:$0xff]
    %v43 = vld [vmem:[#allocation2 + $0x70] sm:$0xff]
    %v44 = vld [vmem:[#allocation2 + $0x78] sm:$0xff]
    %v45 = vadd.f32 %v29, %v30
    %46 = vadd.xlane.f32.xlu0 %v45
    %v47 = vpop.xlane.xlu0 %46
    %v48 = vadd.f32 %v31, %v32
    %49 = vadd.xlane.f32.xlu0 %v48
    %v50 = vpop.xlane.xlu0 %49
    %v51 = vadd.f32 %v33, %v34
    %52 = vadd.xlane.f32.xlu0 %v51
    %v53 = vpop.xlane.xlu0 %52
    %v54 = vadd.f32 %v35, %v36
    %55 = vadd.xlane.f32.xlu0 %v54
    %v56 = vpop.xlane.xlu0 %55
    %v57 = vadd.f32 %v37, %v38
    %58 = vadd.xlane.f32.xlu0 %v57
    %v59 = vpop.xlane.xlu0 %58
    %v60 = vadd.f32 %v39, %v40
    %61 = vadd.xlane.f32.xlu0 %v60
    %v62 = vpop.xlane.xlu0 %61
    %v63 = vadd.f32 %v41, %v42
    %64 = vadd.xlane.f32.xlu0 %v63
    %v65 = vpop.xlane.xlu0 %64
    %v66 = vadd.f32 %v43, %v44
    %67 = vadd.xlane.f32.xlu0 %v66
    %v68 = vpop.xlane.xlu0 %67
    %v69 = vmul.f32 %v29, %v29
    %v70 = vmul.f32 %v30, %v30
    %v71 = vmul.f32 %v31, %v31
    %v72 = vmul.f32 %v32, %v32
    %v73 = vmul.f32 %v33, %v33
    %v74 = vmul.f32 %v34, %v34
    %v75 = vmul.f32 %v35, %v35
    %v76 = vmul.f32 %v36, %v36
    %v77 = vmul.f32 %v37, %v37
    %v78 = vmul.f32 %v38, %v38
    %v79 = vmul.f32 %v39, %v39
    %v80 = vmul.f32 %v40, %v40
    %v81 = vmul.f32 %v41, %v41
    %v82 = vmul.f32 %v42, %v42
    %v83 = vmul.f32 %v43, %v43
    %v84 = vmul.f32 %v44, %v44
    %v85 = vadd.f32 %v69, %v70
    %86 = vadd.xlane.f32.xlu0 %v85
    %v87 = vpop.xlane.xlu0 %86
    %v88 = vadd.f32 %v71, %v72
    %89 = vadd.xlane.f32.xlu0 %v88
    %v90 = vpop.xlane.xlu0 %89
    %v91 = vadd.f32 %v73, %v74
    %92 = vadd.xlane.f32.xlu0 %v91
    %v93 = vpop.xlane.xlu0 %92
    %v94 = vadd.f32 %v75, %v76
    %95 = vadd.xlane.f32.xlu0 %v94
    %v96 = vpop.xlane.xlu0 %95
    %v97 = vadd.f32 %v77, %v78
    %98 = vadd.xlane.f32.xlu0 %v97
    %v99 = vpop.xlane.xlu0 %98
    %v100 = vadd.f32 %v79, %v80
    %101 = vadd.xlane.f32.xlu0 %v100
    %v102 = vpop.xlane.xlu0 %101
    %v103 = vadd.f32 %v81, %v82
    %104 = vadd.xlane.f32.xlu0 %v103
    %v105 = vpop.xlane.xlu0 %104
    %v106 = vadd.f32 %v83, %v84
    %107 = vadd.xlane.f32.xlu0 %v106
    %v108 = vpop.xlane.xlu0 %107
    %v109 = vlaneseq
    %v110 = vshrl.u32 %v109, 7
    %v111 = vadd.s32 %v110, 8
    %v112 = vadd.s32 %v110, 16
    %v113 = vadd.s32 %v110, 24
    %v114 = vadd.s32 %v110, 32
    %v115 = vadd.s32 %v110, 40
    %v116 = vadd.s32 %v110, 48
    %v117 = vadd.s32 %v110, 56
    %v118 = vlaneseq
    %v119 = vand.u32 %v118, 127
    %vm120 = vcmp.lt.s32.totalorder %v110, 0
    %v121 = vsub.s32 0, %v110
    %v122 = vsel %vm120, %v121, %v110
    %v123 = vshrl.u32 %v122, 2
    %v124 = vand.u32 %v122, 3
    %v125 = vsub.s32 0, %v124
    %v126 = vsel %vm120, %v125, %v124
    %vm127 = vcmp.lt.s32.totalorder %v111, 0
    %v128 = vsub.s32 0, %v111
    %v129 = vsel %vm127, %v128, %v111
    %v130 = vshrl.u32 %v129, 2
    %v131 = vand.u32 %v129, 3
    %v132 = vsub.s32 0, %v131
    %v133 = vsel %vm127, %v132, %v131
    %vm134 = vcmp.lt.s32.totalorder %v112, 0
    %v135 = vsub.s32 0, %v112
    %v136 = vsel %vm134, %v135, %v112
    %v137 = vshrl.u32 %v136, 2
    %v138 = vand.u32 %v136, 3
    %v139 = vsub.s32 0, %v138
    %v140 = vsel %vm134, %v139, %v138
    %vm141 = vcmp.lt.s32.totalorder %v113, 0
    %v142 = vsub.s32 0, %v113
    %v143 = vsel %vm141, %v142, %v113
    %v144 = vshrl.u32 %v143, 2
    %v145 = vand.u32 %v143, 3
    %v146 = vsub.s32 0, %v145
    %v147 = vsel %vm141, %v146, %v145
    %vm148 = vcmp.lt.s32.totalorder %v114, 0
    %v149 = vsub.s32 0, %v114
    %v150 = vsel %vm148, %v149, %v114
    %v151 = vshrl.u32 %v150, 2
    %v152 = vand.u32 %v150, 3
    %v153 = vsub.s32 0, %v152
    %v154 = vsel %vm148, %v153, %v152
    %vm155 = vcmp.lt.s32.totalorder %v115, 0
    %v156 = vsub.s32 0, %v115
    %v157 = vsel %vm155, %v156, %v115
    %v158 = vshrl.u32 %v157, 2
    %v159 = vand.u32 %v157, 3
    %v160 = vsub.s32 0, %v159
    %v161 = vsel %vm155, %v160, %v159
    %vm162 = vcmp.lt.s32.totalorder %v116, 0
    %v163 = vsub.s32 0, %v116
    %v164 = vsel %vm162, %v163, %v116
    %v165 = vshrl.u32 %v164, 2
    %v166 = vand.u32 %v164, 3
    %v167 = vsub.s32 0, %v166
    %v168 = vsel %vm162, %v167, %v166
    %vm169 = vcmp.lt.s32.totalorder %v117, 0
    %v170 = vsub.s32 0, %v117
    %v171 = vsel %vm169, %v170, %v117
    %v172 = vshrl.u32 %v171, 2
    %v173 = vand.u32 %v171, 3
    %v174 = vsub.s32 0, %v173
    %v175 = vsel %vm169, %v174, %v173
    %vm176 = vcmp.ne.s32.totalorder %v126, 0
    %vm177 = vcmp.ne.s32.totalorder %v133, 0
    %vm178 = vcmp.ne.s32.totalorder %v140, 0
    %vm179 = vcmp.ne.s32.totalorder %v147, 0
    %vm180 = vcmp.ne.s32.totalorder %v154, 0
    %vm181 = vcmp.ne.s32.totalorder %v161, 0
    %vm182 = vcmp.ne.s32.totalorder %v168, 0
    %vm183 = vcmp.ne.s32.totalorder %v175, 0
    %vm184 = vcmp.lt.s32.totalorder %v126, 0
    %vm185 = vcmp.lt.s32.totalorder %v133, 0
    %vm186 = vcmp.lt.s32.totalorder %v140, 0
    %vm187 = vcmp.lt.s32.totalorder %v147, 0
    %vm188 = vcmp.lt.s32.totalorder %v154, 0
    %vm189 = vcmp.lt.s32.totalorder %v161, 0
    %vm190 = vcmp.lt.s32.totalorder %v168, 0
    %vm191 = vcmp.lt.s32.totalorder %v175, 0
    %vm192 = vmand %vm184, %vm176
    %vm193 = vmand %vm185, %vm177
    %vm194 = vmand %vm186, %vm178
    %vm195 = vmand %vm187, %vm179
    %vm196 = vmand %vm188, %vm180
    %vm197 = vmand %vm189, %vm181
    %vm198 = vmand %vm190, %vm182
    %vm199 = vmand %vm191, %vm183
    %v200 = vadd.s32 %v126, 4
    %v201 = vadd.s32 %v133, 4
    %v202 = vadd.s32 %v140, 4
    %v203 = vadd.s32 %v147, 4
    %v204 = vadd.s32 %v154, 4
    %v205 = vadd.s32 %v161, 4
    %v206 = vadd.s32 %v168, 4
    %v207 = vadd.s32 %v175, 4
    %v208 = vsel %vm192, %v200, %v126
    %v209 = vsel %vm193, %v201, %v133
    %v210 = vsel %vm194, %v202, %v140
    %v211 = vsel %vm195, %v203, %v147
    %v212 = vsel %vm196, %v204, %v154
    %v213 = vsel %vm197, %v205, %v161
    %v214 = vsel %vm198, %v206, %v168
    %v215 = vsel %vm199, %v207, %v175
    %vm216 = vcmp.eq.s32.totalorder %v208, %v119
    %vm217 = vcmp.eq.s32.totalorder %v209, %v119
    %vm218 = vcmp.eq.s32.totalorder %v210, %v119
    %vm219 = vcmp.eq.s32.totalorder %v211, %v119
    %vm220 = vcmp.eq.s32.totalorder %v212, %v119
    %vm221 = vcmp.eq.s32.totalorder %v213, %v119
    %vm222 = vcmp.eq.s32.totalorder %v214, %v119
    %vm223 = vcmp.eq.s32.totalorder %v215, %v119
    %v224 = vsel %vm216, 1, 0
    %v225 = vsel %vm217, 1, 0
    %v226 = vsel %vm218, 1, 0
    %v227 = vsel %vm219, 1, 0
    %v228 = vsel %vm220, 1, 0
    %v229 = vsel %vm221, 1, 0
    %v230 = vsel %vm222, 1, 0
    %v231 = vsel %vm223, 1, 0
    %v232 = vcvt.s32.f32 %v224
    %v233 = vcvt.s32.f32 %v225
    %v234 = vcvt.s32.f32 %v226
    %v235 = vcvt.s32.f32 %v227
    %v236 = vcvt.s32.f32 %v228
    %v237 = vcvt.s32.f32 %v229
    %v238 = vcvt.s32.f32 %v230
    %v239 = vcvt.s32.f32 %v231
    %v240 = vmul.f32 %v47, %v232
    %v241 = vmul.f32 %v50, %v233
    %v242 = vmul.f32 %v53, %v234
    %v243 = vmul.f32 %v56, %v235
    %v244 = vmul.f32 %v59, %v236
    %v245 = vmul.f32 %v62, %v237
    %v246 = vmul.f32 %v65, %v238
    %v247 = vmul.f32 %v68, %v239
    %vm248 = vcmask 31744
    %v249 = vsel %vm248, %v240, 0.0
    %v250 = vsel %vm248, %v241, 0.0
    %v251 = vadd.f32 %v249, %v250
    %v252 = vsel %vm248, %v242, 0.0
    %v253 = vadd.f32 %v251, %v252
    %v254 = vsel %vm248, %v243, 0.0
    %v255 = vadd.f32 %v253, %v254
    %v256 = vsel %vm248, %v244, 0.0
    %v257 = vadd.f32 %v255, %v256
    %v258 = vsel %vm248, %v245, 0.0
    %v259 = vadd.f32 %v257, %v258
    %v260 = vsel %vm248, %v246, 0.0
    %v261 = vadd.f32 %v259, %v260
    %v262 = vsel %vm248, %v247, 0.0
    %v263 = vadd.f32 %v261, %v262
    %v264 = vrot.slane %v263, 4
    %v265 = vadd.f32 %v263, %v264
    %v266 = vrot.slane %v265, 2
    %v267 = vadd.f32 %v265, %v266
    %v268 = vrot.slane %v267, 1
    %v269 = vadd.f32 %v267, %v268
    %v270 = vmul.f32 %v87, %v232
    %v271 = vmul.f32 %v90, %v233
    %v272 = vmul.f32 %v93, %v234
    %v273 = vmul.f32 %v96, %v235
    %v274 = vmul.f32 %v99, %v236
    %v275 = vmul.f32 %v102, %v237
    %v276 = vmul.f32 %v105, %v238
    %v277 = vmul.f32 %v108, %v239
    %v278 = vsel %vm248, %v270, 0.0
    %v279 = vsel %vm248, %v271, 0.0
    %v280 = vadd.f32 %v278, %v279
    %v281 = vsel %vm248, %v272, 0.0
    %v282 = vadd.f32 %v280, %v281
    %v283 = vsel %vm248, %v273, 0.0
    %v284 = vadd.f32 %v282, %v283
    %v285 = vsel %vm248, %v274, 0.0
    %v286 = vadd.f32 %v284, %v285
    %v287 = vsel %vm248, %v275, 0.0
    %v288 = vadd.f32 %v286, %v287
    %v289 = vsel %vm248, %v276, 0.0
    %v290 = vadd.f32 %v288, %v289
    %v291 = vsel %vm248, %v277, 0.0
    %v292 = vadd.f32 %v290, %v291
    %v293 = vrot.slane %v292, 4
    %v294 = vadd.f32 %v292, %v293
    %v295 = vrot.slane %v294, 2
    %v296 = vadd.f32 %v294, %v295
    %v297 = vrot.slane %v296, 1
    %v298 = vadd.f32 %v296, %v297
    %v299 = vmul.f32 %v269, 0.00024414063
    %v300 = vmul.f32 %v298, 0.00024414063
    %v301 = vmul.f32 %v299, %v299
    %v302 = vsub.f32 %v300, %v301
    %v303 = vmax.f32 %v302, 0.0
    %v304 = vadd.f32 %v303, 1e-05
    %v305 = vrsqrt.pop %v304
    %v306 = vld [vmem:[%s1] sm:$0x1]
    %v307 = vld [vmem:[%s2] sm:$0x1]
    %v308 = vmul.f32 %v306, %v305
    %v309 = vmul.f32 %v299, %v308
    %v310 = vsub.f32 %v307, %v309
    %v312 = vlaneseq
    %v313 = vshrl.u32 %v312, 7
    %v314 = vsub.s32 0, %v313
    %v315 = vrot.slane %v308, %v314
    %v317 = vmul.f32 %v232, %v315
    %v318 = vmul.f32 %v233, %v315
    %v319 = vmul.f32 %v234, %v315
    %v320 = vmul.f32 %v235, %v315
    %v321 = vmul.f32 %v236, %v315
    %v322 = vmul.f32 %v237, %v315
    %v323 = vmul.f32 %v238, %v315
    %v324 = vmul.f32 %v239, %v315
    %v325 = vsel %vm248, %v317, 0.0
    %326 = vadd.xlane.f32.xlu0 %v325
    %v327 = vpop.xlane.xlu0 %326
    %v328 = vsel %vm248, %v318, 0.0
    %329 = vadd.xlane.f32.xlu0 %v328
    %v330 = vpop.xlane.xlu0 %329
    %v331 = vsel %vm248, %v319, 0.0
    %332 = vadd.xlane.f32.xlu0 %v331
    %v333 = vpop.xlane.xlu0 %332
    %v334 = vsel %vm248, %v320, 0.0
    %335 = vadd.xlane.f32.xlu0 %v334
    %v336 = vpop.xlane.xlu0 %335
    %v337 = vsel %vm248, %v321, 0.0
    %338 = vadd.xlane.f32.xlu0 %v337
    %v339 = vpop.xlane.xlu0 %338
    %v340 = vsel %vm248, %v322, 0.0
    %341 = vadd.xlane.f32.xlu0 %v340
    %v342 = vpop.xlane.xlu0 %341
    %v343 = vsel %vm248, %v323, 0.0
    %344 = vadd.xlane.f32.xlu0 %v343
    %v345 = vpop.xlane.xlu0 %344
    %v346 = vsel %vm248, %v324, 0.0
    %347 = vadd.xlane.f32.xlu0 %v346
    %v348 = vpop.xlane.xlu0 %347
    %v350 = vlaneseq
    %v351 = vshrl.u32 %v350, 7
    %v352 = vsub.s32 0, %v351
    %v353 = vrot.slane %v310, %v352
    %v355 = vmul.f32 %v232, %v353
    %v356 = vmul.f32 %v233, %v353
    %v357 = vmul.f32 %v234, %v353
    %v358 = vmul.f32 %v235, %v353
    %v359 = vmul.f32 %v236, %v353
    %v360 = vmul.f32 %v237, %v353
    %v361 = vmul.f32 %v238, %v353
    %v362 = vmul.f32 %v239, %v353
    %v363 = vsel %vm248, %v355, 0.0
    %364 = vadd.xlane.f32.xlu0 %v363
    %v365 = vpop.xlane.xlu0 %364
    %v366 = vsel %vm248, %v356, 0.0
    %367 = vadd.xlane.f32.xlu0 %v366
    %v368 = vpop.xlane.xlu0 %367
    %v369 = vsel %vm248, %v357, 0.0
    %370 = vadd.xlane.f32.xlu0 %v369
    %v371 = vpop.xlane.xlu0 %370
    %v372 = vsel %vm248, %v358, 0.0
    %373 = vadd.xlane.f32.xlu0 %v372
    %v374 = vpop.xlane.xlu0 %373
    %v375 = vsel %vm248, %v359, 0.0
    %376 = vadd.xlane.f32.xlu0 %v375
    %v377 = vpop.xlane.xlu0 %376
    %v378 = vsel %vm248, %v360, 0.0
    %379 = vadd.xlane.f32.xlu0 %v378
    %v380 = vpop.xlane.xlu0 %379
    %v381 = vsel %vm248, %v361, 0.0
    %382 = vadd.xlane.f32.xlu0 %v381
    %v383 = vpop.xlane.xlu0 %382
    %v384 = vsel %vm248, %v362, 0.0
    %385 = vadd.xlane.f32.xlu0 %v384
    %v386 = vpop.xlane.xlu0 %385
    %v387 = vmul.f32 %v29, %v327
    %v388 = vmul.f32 %v30, %v327
    %v389 = vmul.f32 %v31, %v330
    %v390 = vmul.f32 %v32, %v330
    %v391 = vmul.f32 %v33, %v333
    %v392 = vmul.f32 %v34, %v333
    %v393 = vmul.f32 %v35, %v336
    %v394 = vmul.f32 %v36, %v336
    %v395 = vmul.f32 %v37, %v339
    %v396 = vmul.f32 %v38, %v339
    %v397 = vmul.f32 %v39, %v342
    %v398 = vmul.f32 %v40, %v342
    %v399 = vmul.f32 %v41, %v345
    %v400 = vmul.f32 %v42, %v345
    %v401 = vmul.f32 %v43, %v348
    %v402 = vmul.f32 %v44, %v348
    %v403 = vadd.f32 %v387, %v365
    %v404 = vadd.f32 %v388, %v365
    %v405 = vadd.f32 %v389, %v368
    %v406 = vadd.f32 %v390, %v368
    %v407 = vadd.f32 %v391, %v371
    %v408 = vadd.f32 %v392, %v371
    %v409 = vadd.f32 %v393, %v374
    %v410 = vadd.f32 %v394, %v374
    %v411 = vadd.f32 %v395, %v377
    %v412 = vadd.f32 %v396, %v377
    %v413 = vadd.f32 %v397, %v380
    %v414 = vadd.f32 %v398, %v380
    %v415 = vadd.f32 %v399, %v383
    %v416 = vadd.f32 %v400, %v383
    %v417 = vadd.f32 %v401, %v386
    %v418 = vadd.f32 %v402, %v386
    %419 = vst [vmem:[#allocation5] sm:$0xff] %v403
    %420 = vst [vmem:[#allocation5 + $0x8] sm:$0xff] %v404
    %421 = vst [vmem:[#allocation5 + $0x10] sm:$0xff] %v405
    %422 = vst [vmem:[#allocation5 + $0x18] sm:$0xff] %v406
    %423 = vst [vmem:[#allocation5 + $0x20] sm:$0xff] %v407
    %424 = vst [vmem:[#allocation5 + $0x28] sm:$0xff] %v408
    %425 = vst [vmem:[#allocation5 + $0x30] sm:$0xff] %v409
    %426 = vst [vmem:[#allocation5 + $0x38] sm:$0xff] %v410
    %427 = vst [vmem:[#allocation5 + $0x40] sm:$0xff] %v411
    %428 = vst [vmem:[#allocation5 + $0x48] sm:$0xff] %v412
    %429 = vst [vmem:[#allocation5 + $0x50] sm:$0xff] %v413
    %430 = vst [vmem:[#allocation5 + $0x58] sm:$0xff] %v414
    %431 = vst [vmem:[#allocation5 + $0x60] sm:$0xff] %v415
    %432 = vst [vmem:[#allocation5 + $0x68] sm:$0xff] %v416
    %433 = vst [vmem:[#allocation5 + $0x70] sm:$0xff] %v417
    %434 = vst [vmem:[#allocation5 + $0x78] sm:$0xff] %v418
    // Predicated region
    $region18: #{tpu_custom_call.1} parent=1 // pred_check
      _
    $region19: #{tpu_custom_call.1} parent=1 // pred_check_branch
      %436 = sbr.rel (0) target = $region21
    $region20: #{tpu_custom_call.1} parent=1 // pred_region
      %s438 = ssub.s32 2048, 2048
      %439 = vsyncadd [#allocation4], %s438
      %s440 = sshll.u32 [#allocation5], 4
      %s441 = int_to_ptr.vmem [resolvable:$true] %s440
      %446 = dma.vmem_to_hbm [thread:$0]  %s441, 2048, %s3, [#allocation4], 256, 256, 16
    $region21: #{tpu_custom_call.1} parent=1 // pred_fallthru
      _
    // Predicated region
    $region22: #{tpu_custom_call.1} parent=1 // pred_check
      _
    $region23: #{tpu_custom_call.1} parent=1 // pred_check_branch
      %448 = sbr.rel (0) target = $region25
    $region24: #{tpu_custom_call.1} parent=1 // pred_region
      %449 = dma.done [#allocation4], 2048
    $region25: #{tpu_custom_call.1} parent=1 // pred_fallthru
      _
    %450 = vsyncpa [#allocation3], 1
    %451 = vsyncpa [#allocation4], 1

</llo_original>
